<compile_context>
chip_gen: v5e
topology: v5e:2x2
jax: 0.10.0
libtpu: 0.0.40
codegen_flags: <defaults>
</compile_context>

<pallas_src>
import jax
import jax.numpy as jnp
from jax.experimental import pallas as pl
from jax.experimental.pallas import tpu as pltpu


def _cdiv(a, b):
    return -(-a // b)


def _round_up(n, m):
    return _cdiv(n, m) * m


def _vmem_capacity_bytes():
    try:
        info = pltpu.get_tpu_info()
        cap = getattr(info, "vmem_capacity_bytes", None)
        if cap:
            return int(cap)
    except Exception:
        pass
    return 64 << 20  # conservative fallback: v7x has 64 MiB per TensorCore


def _chip_profile():
    """Returns (vmem_capacity, tm_target, th_target, two_tensorcores)."""
    cap = _vmem_capacity_bytes()
    kind = ""
    try:
        kind = jax.devices()[0].device_kind.lower()
    except Exception:
        pass
    if cap <= (64 << 20):        # v7x-like: 64 MiB VMEM per TC, 2 TCs/chip
        return cap, 512, 512, True
    if "v5" in kind:             # v5e: already MXU-bound around tm~256-512
        return cap, 512, 1024, False
    return cap, 1024, 1024, False  # v6e-like: needs tm >= ~640 rows for MXU roofline


def _th_candidates(H):
    """Valid hidden-tile sizes: multiples of 128 dividing H (plus H), descending."""
    cands = []
    if H % 128 == 0:
        d = H
        while d >= 128:
            if H % d == 0:
                cands.append(d)
            d -= 128
    if H not in cands:
        cands.insert(0, H)
    return cands


def _vmem_footprint(tm, th, C, itemsize):
    """Conservative per-step VMEM bytes (double buffers for all pipelined operands)."""
    db = 2
    buffers = db * itemsize * (tm * C      # x row tile
                               + C * th    # W1 hidden slice
                               + th        # b1 hidden slice
                               + th * C    # W2 hidden slice
                               + C         # b2
                               + tm * C)   # output tile
    acc = tm * C * 4                       # f32 accumulator (scratch or output)
    inter = 2 * tm * th * 4                # h / g f32 intermediates
    return buffers + acc + inter


def _select_tiles(M, C, H, itemsize, tm_req, th_req):
    cap, tm_target, th_target, two_tc = _chip_profile()
    budget = int(cap * 0.75)
    packing = {1: 32, 2: 16}.get(itemsize, 8)  # sublane packing per dtype width

    if tm_req is not None:
        tm_target = max(int(tm_req), packing)
    if th_req is not None:
        th_target = int(th_req)

    # Row tile: as large as the target, never (much) larger than the token count.
    tm = min(_round_up(tm_target, packing), _round_up(M, packing))
    # v7x megacore: make sure there are >= 2 row tiles so both TCs get work.
    if two_tc and M > packing and _cdiv(M, tm) < 2:
        tm = _round_up(_cdiv(M, 2), packing)
    # Even out row tiles so the last tile is not mostly padding.
    tm = _round_up(_cdiv(M, _cdiv(M, tm)), packing)

    cands = _th_candidates(H)
    th = next((c for c in cands if c <= th_target), cands[-1])

    # Shrink tiles until the conservative footprint fits the VMEM budget.
    while _vmem_footprint(tm, th, C, itemsize) > budget:
        smaller_th = next((c for c in cands if c < th), None)
        if smaller_th is not None and th > 256:
            th = smaller_th
        elif tm > 256:
            tm = max(_round_up(tm // 2, packing), packing)
        elif smaller_th is not None:
            th = smaller_th
        elif tm > packing:
            tm = max(_round_up(tm // 2, packing), packing)
        else:
            break

    fp = _vmem_footprint(tm, th, C, itemsize)
    vmem_limit = int(min(max(int(1.3 * fp), 32 << 20), int(0.92 * cap)))
    return tm, th, vmem_limit


def _fused_mlp_partial(x_ref, w1_ref, b1_ref, w2_ref):
    """One hidden-block partial: GELU_tanh(x @ W1_blk + b1_blk) @ W2_blk."""
    # c_fc slice: (tm, C) @ (C, th) -> (tm, th); MXU, f32 accumulation.
    h = jnp.dot(x_ref[...], w1_ref[0], preferred_element_type=jnp.float32)
    h = h + b1_ref[...].astype(jnp.float32)
    # tanh-GELU in f32 (matches torch.nn.GELU(approximate='tanh')).
    c0 = 0.7978845608028654  # sqrt(2/pi)
    g = 0.5 * h * (1.0 + jnp.tanh(c0 * h * (1.0 + 0.044715 * h * h)))
    # Partial c_proj: (tm, th) @ (th, C) -> (tm, C); feed MXU in weight dtype.
    return jnp.dot(g.astype(w2_ref.dtype), w2_ref[...],
                   preferred_element_type=jnp.float32)


def _mlp_kernel_inplace(x_ref, w1_ref, b1_ref, w2_ref, b2_ref, o_ref):
    """f32 output: accumulate straight into the resident output tile (no scratch)."""
    k = pl.program_id(1)
    p = _fused_mlp_partial(x_ref, w1_ref, b1_ref, w2_ref)

    @pl.when(k == 0)
    def _first():
        o_ref[...] = p + b2_ref[...].astype(jnp.float32)

    @pl.when(k != 0)
    def _rest():
        o_ref[...] += p


def _mlp_kernel_acc(x_ref, w1_ref, b1_ref, w2_ref, b2_ref, o_ref, acc_ref):
    """Narrow output dtype: f32 scratch accumulator, cast on the last hidden block."""
    k = pl.program_id(1)
    p = _fused_mlp_partial(x_ref, w1_ref, b1_ref, w2_ref)

    @pl.when(k == 0)
    def _first():
        acc_ref[...] = p + b2_ref[...].astype(jnp.float32)

    @pl.when(k != 0)
    def _rest():
        acc_ref[...] += p

    @pl.when(k == pl.num_programs(1) - 1)
    def _finalize():
        o_ref[...] = acc_ref[...].astype(o_ref.dtype)


def mlp_pallas(x, w1, b1, w2, b2, *, tm=None, th=None):
    """y = GELU_tanh(x @ w1 + b1) @ w2 + b2.

    x: (B, T, C); w1: (C, 4C); b1: (4C,); w2: (4C, C); b2: (C,).
    Weights are stored transposed vs. torch.nn.Linear (so the kernel does x @ W).
    """
    B, T, C = x.shape
    Cw, H = w1.shape
    assert Cw == C and w2.shape == (H, C)
    assert b1.shape == (H,) and b2.shape == (C,)

    M = B * T
    itemsize = jnp.dtype(x.dtype).itemsize
    tm, th, vmem_limit = _select_tiles(M, C, H, itemsize, tm, th)
    nk = H // th

    x2 = x.reshape(M, C)
    M_pad = _round_up(M, tm)
    if M_pad != M:
        x2 = jnp.pad(x2, ((0, M_pad - M), (0, 0)))

    # Block W1 to (nk, C, th) so each hidden slice is a single contiguous DMA.
    # TODO(synk): in a real model do this once at parameter-load time, not per call.
    if nk > 1:
        w1_blk = w1.reshape(C, nk, th).transpose(1, 0, 2)
    else:
        w1_blk = w1.reshape(1, C, H)
    b1_2 = b1.reshape(1, H)
    b2_2 = b2.reshape(1, C)

    grid = (M_pad // tm, nk)
    in_specs = [
        pl.BlockSpec((tm, C), lambda i, k: (i, 0)),        # x row tile (resident over k)
        pl.BlockSpec((1, C, th), lambda i, k: (k, 0, 0)),  # W1 hidden block (contiguous)
        pl.BlockSpec((1, th), lambda i, k: (0, k)),        # b1 hidden block
        pl.BlockSpec((th, C), lambda i, k: (k, 0)),        # W2 hidden block
        pl.BlockSpec((1, C), lambda i, k: (0, 0)),         # b2
    ]
    out_spec = pl.BlockSpec((tm, C), lambda i, k: (i, 0))

    out_is_f32 = jnp.dtype(x.dtype) == jnp.float32
    kernel = _mlp_kernel_inplace if out_is_f32 else _mlp_kernel_acc
    scratch = [] if out_is_f32 else [pltpu.VMEM((tm, C), jnp.float32)]

    out = pl.pallas_call(
        kernel,
        out_shape=jax.ShapeDtypeStruct((M_pad, C), x.dtype),
        grid_spec=pltpu.PrefetchScalarGridSpec(
            num_scalar_prefetch=0,
            grid=grid,
            in_specs=in_specs,
            out_specs=out_spec,
            scratch_shapes=scratch,
        ),
        compiler_params=pltpu.CompilerParams(
            dimension_semantics=("parallel", "arbitrary"),
            vmem_limit_bytes=vmem_limit,
        ),
    )(x2, w1_blk, b1_2, w2, b2_2)

    if M_pad != M:
        out = out[:M]
    return out.reshape(B, T, C)


def mlp_reference(x, w1, b1, w2, b2):
    x = x.astype(jnp.float32)
    h = jnp.einsum("btc,ch->bth", x, w1.astype(jnp.float32)) + b1.astype(jnp.float32)
    c0 = 0.7978845608028654
    g = 0.5 * h * (1.0 + jnp.tanh(c0 * (h + 0.044715 * h ** 3)))
    return jnp.einsum("bth,hc->btc", g, w2.astype(jnp.float32)) + b2.astype(jnp.float32)


if __name__ == "__main__":
    key = jax.random.PRNGKey(0)
    kx, k1, k2, k3, k4 = jax.random.split(key, 5)

    # Small config consistent with the module: n_embd=32, hidden=4*32=128.
    B, T, C = 2, 8, 32
    H = 4 * C
    x = jax.random.normal(kx, (B, T, C), dtype=jnp.float32)
    w1 = jax.random.normal(k1, (C, H), dtype=jnp.float32) * (1.0 / C ** 0.5)
    b1 = jax.random.normal(k2, (H,), dtype=jnp.float32) * 0.01
    w2 = jax.random.normal(k3, (H, C), dtype=jnp.float32) * (1.0 / H ** 0.5)
    b2 = jax.random.normal(k4, (C,), dtype=jnp.float32) * 0.01

    y = jax.block_until_ready(mlp_pallas(x, w1, b1, w2, b2))
    y_ref = mlp_reference(x, w1, b1, w2, b2)
    assert y.shape == (B, T, C)
    assert jnp.allclose(y, y_ref, rtol=1e-4, atol=1e-4), "mismatch vs reference"

    # Padded-row path: M = 2*13 = 26 tokens (not a multiple of the sublane tile).
    x_odd = jax.random.normal(kx, (2, 13, C), dtype=jnp.float32)
    y_odd = jax.block_until_ready(mlp_pallas(x_odd, w1, b1, w2, b2))
    assert jnp.allclose(y_odd, mlp_reference(x_odd, w1, b1, w2, b2),
                        rtol=1e-4, atol=1e-4), "mismatch vs reference (padded)"

    # bf16 + multiple hidden blocks: exercises the f32 scratch-accumulator kernel
    # and the contiguous blocked-W1 layout (n_embd=128, hidden=512, th=128 -> 4 blocks).
    C2, H2 = 128, 512
    xb = jax.random.normal(kx, (2, 8, C2), dtype=jnp.bfloat16)
    w1b = (jax.random.normal(k1, (C2, H2)) * (1.0 / C2 ** 0.5)).astype(jnp.bfloat16)
    b1b = (jax.random.normal(k2, (H2,)) * 0.01).astype(jnp.bfloat16)
    w2b = (jax.random.normal(k3, (H2, C2)) * (1.0 / H2 ** 0.5)).astype(jnp.bfloat16)
    b2b = (jax.random.normal(k4, (C2,)) * 0.01).astype(jnp.bfloat16)
    yb = jax.block_until_ready(mlp_pallas(xb, w1b, b1b, w2b, b2b, th=128))
    yb_ref = mlp_reference(xb, w1b, b1b, w2b, b2b)
    assert jnp.allclose(yb.astype(jnp.float32), yb_ref, rtol=5e-2, atol=5e-2), \
        "mismatch vs reference (bf16)"

    print("KERNEL_OK")
</pallas_src>

<mosaic_0001>
module attributes {stable_mosaic.version = 11 : i64} {
  func.func @_mlp_kernel_inplace(%arg0: i32, %arg1: i32, %arg2: memref<8x32xf32, #tpu.memory_space<vmem>>, %arg3: memref<1x32x128xf32, #tpu.memory_space<vmem>>, %arg4: memref<1x128xf32, #tpu.memory_space<vmem>>, %arg5: memref<128x32xf32, #tpu.memory_space<vmem>>, %arg6: memref<1x32xf32, #tpu.memory_space<vmem>>, %arg7: memref<8x32xf32, #tpu.memory_space<vmem>>) attributes {dimension_semantics = [#tpu.dimension_semantics<parallel>, #tpu.dimension_semantics<arbitrary>], iteration_bounds = array<i64: 2, 1>, scalar_prefetch = 0 : i64, scratch_operands = 0 : i64, tpu.core_type = #tpu.core_type<tc>, window_params = [{transform_indices = @transform_0, window_bounds = array<i64: 8, 32>}, {transform_indices = @transform_1, window_bounds = array<i64: 1, 32, 128>}, {transform_indices = @transform_2, window_bounds = array<i64: 1, 128>}, {transform_indices = @transform_3, window_bounds = array<i64: 128, 32>}, {pipeline_mode = #tpu.pipeline_mode<synchronous>, transform_indices = @transform_4, window_bounds = array<i64: 1, 32>}, {transform_indices = @transform_5, window_bounds = array<i64: 8, 32>}]} {
    %c0 = arith.constant 0 : index
    %c0_0 = arith.constant 0 : index
    %0 = vector.load %arg2[%c0, %c0_0] : memref<8x32xf32, #tpu.memory_space<vmem>>, vector<8x32xf32>
    %c0_1 = arith.constant 0 : index
    %c0_2 = arith.constant 0 : index
    %c0_3 = arith.constant 0 : index
    %1 = vector.load %arg3[%c0_1, %c0_2, %c0_3] : memref<1x32x128xf32, #tpu.memory_space<vmem>>, vector<1x32x128xf32>
    %2 = vector.shape_cast %1 : vector<1x32x128xf32> to vector<32x128xf32>
    %cst = arith.constant dense<0.000000e+00> : vector<8x128xf32>
    %3 = tpu.matmul %0, %2, %cst {dimension_numbers = #tpu.dot_dimension_numbers<[1], [0], [0], [1], [0, 0, 1, 1], [], []>} : vector<8x32xf32>, vector<32x128xf32>, vector<8x128xf32> -> vector<8x128xf32>
    %c0_4 = arith.constant 0 : index
    %c0_5 = arith.constant 0 : index
    %4 = vector.load %arg4[%c0_4, %c0_5] : memref<1x128xf32, #tpu.memory_space<vmem>>, vector<1x128xf32>
    %5 = vector.broadcast %4 : vector<1x128xf32> to vector<8x128xf32>
    %6 = arith.addf %3, %5 : vector<8x128xf32>
    %cst_6 = arith.constant 5.000000e-01 : f32
    %7 = vector.broadcast %cst_6 : f32 to vector<8x128xf32>
    %8 = arith.mulf %7, %6 : vector<8x128xf32>
    %cst_7 = arith.constant 0.797884583 : f32
    %9 = vector.broadcast %cst_7 : f32 to vector<8x128xf32>
    %10 = arith.mulf %9, %6 : vector<8x128xf32>
    %cst_8 = arith.constant 4.471500e-02 : f32
    %11 = vector.broadcast %cst_8 : f32 to vector<8x128xf32>
    %12 = arith.mulf %11, %6 : vector<8x128xf32>
    %13 = arith.mulf %12, %6 : vector<8x128xf32>
    %cst_9 = arith.constant 1.000000e+00 : f32
    %14 = vector.broadcast %cst_9 : f32 to vector<8x128xf32>
    %15 = arith.addf %14, %13 : vector<8x128xf32>
    %16 = arith.mulf %10, %15 : vector<8x128xf32>
    %17 = math.tanh %16 : vector<8x128xf32>
    %cst_10 = arith.constant 1.000000e+00 : f32
    %18 = vector.broadcast %cst_10 : f32 to vector<8x128xf32>
    %19 = arith.addf %18, %17 : vector<8x128xf32>
    %20 = arith.mulf %8, %19 : vector<8x128xf32>
    %c0_11 = arith.constant 0 : index
    %c0_12 = arith.constant 0 : index
    %21 = vector.load %arg5[%c0_11, %c0_12] : memref<128x32xf32, #tpu.memory_space<vmem>>, vector<128x32xf32>
    %cst_13 = arith.constant dense<0.000000e+00> : vector<8x32xf32>
    %22 = tpu.matmul %20, %21, %cst_13 {dimension_numbers = #tpu.dot_dimension_numbers<[1], [0], [0], [1], [0, 0, 1, 1], [], []>} : vector<8x128xf32>, vector<128x32xf32>, vector<8x32xf32> -> vector<8x32xf32>
    %c0_i32 = arith.constant 0 : i32
    %23 = arith.cmpi eq, %arg1, %c0_i32 : i32
    %24 = arith.extui %23 : i1 to i32
    %c0_i32_14 = arith.constant 0 : i32
    %25 = arith.cmpi ne, %24, %c0_i32_14 : i32
    scf.if %25 {
      %c0_17 = arith.constant 0 : index
      %c0_18 = arith.constant 0 : index
      %29 = vector.load %arg6[%c0_17, %c0_18] : memref<1x32xf32, #tpu.memory_space<vmem>>, vector<1x32xf32>
      %30 = vector.broadcast %29 : vector<1x32xf32> to vector<8x32xf32>
      %31 = arith.addf %22, %30 : vector<8x32xf32>
      %c0_19 = arith.constant 0 : index
      %c0_20 = arith.constant 0 : index
      %32 = vector.load %arg7[%c0_19, %c0_20] : memref<8x32xf32, #tpu.memory_space<vmem>>, vector<8x32xf32>
      tpu.vector_store %arg7[%c0_19, %c0_20], %31 {strides = array<i32>} : memref<8x32xf32, #tpu.memory_space<vmem>>, vector<8x32xf32>,
    } else {
    }
    %c0_i32_15 = arith.constant 0 : i32
    %26 = arith.cmpi ne, %arg1, %c0_i32_15 : i32
    %27 = arith.extui %26 : i1 to i32
    %c0_i32_16 = arith.constant 0 : i32
    %28 = arith.cmpi ne, %27, %c0_i32_16 : i32
    scf.if %28 {
      %c0_17 = arith.constant 0 : index
      %c0_18 = arith.constant 0 : index
      %29 = vector.load %arg7[%c0_17, %c0_18] : memref<8x32xf32, #tpu.memory_space<vmem>>, vector<8x32xf32>
      %30 = arith.addf %29, %22 : vector<8x32xf32>
      %c0_19 = arith.constant 0 : index
      %c0_20 = arith.constant 0 : index
      %31 = vector.load %arg7[%c0_19, %c0_20] : memref<8x32xf32, #tpu.memory_space<vmem>>, vector<8x32xf32>
      tpu.vector_store %arg7[%c0_19, %c0_20], %30 {strides = array<i32>} : memref<8x32xf32, #tpu.memory_space<vmem>>, vector<8x32xf32>,
    } else {
    }
    return
  }
  func.func @transform_0(%arg0: i32, %arg1: i32) -> (i32, i32) {
    %c0_i32 = arith.constant 0 : i32
    %c0_i32_0 = arith.constant 0 : i32
    return %arg0, %c0_i32 : i32, i32
  }
  func.func @transform_1(%arg0: i32, %arg1: i32) -> (i32, i32, i32) {
    %c0_i32 = arith.constant 0 : i32
    %c0_i32_0 = arith.constant 0 : i32
    %c0_i32_1 = arith.constant 0 : i32
    return %arg1, %c0_i32, %c0_i32_0 : i32, i32, i32
  }
  func.func @transform_2(%arg0: i32, %arg1: i32) -> (i32, i32) {
    %c0_i32 = arith.constant 0 : i32
    %c0_i32_0 = arith.constant 0 : i32
    return %c0_i32, %arg1 : i32, i32
  }
  func.func @transform_3(%arg0: i32, %arg1: i32) -> (i32, i32) {
    %c0_i32 = arith.constant 0 : i32
    %c0_i32_0 = arith.constant 0 : i32
    return %arg1, %c0_i32 : i32, i32
  }
  func.func @transform_4(%arg0: i32, %arg1: i32) -> (i32, i32) {
    %c0_i32 = arith.constant 0 : i32
    %c0_i32_0 = arith.constant 0 : i32
    %c0_i32_1 = arith.constant 0 : i32
    return %c0_i32, %c0_i32_0 : i32, i32
  }
  func.func @transform_5(%arg0: i32, %arg1: i32) -> (i32, i32) {
    %c0_i32 = arith.constant 0 : i32
    %c0_i32_0 = arith.constant 0 : i32
    return %arg0, %c0_i32 : i32, i32
  }
}

</mosaic_0001>

<llo_original>
// kernel: tpu_custom_call.1
$region0: #{tpu_custom_call.1}
  #allocation0 [shape = 'u32[]', space=smem, size = 0x4, offset = 0x4, fixed_abs, tag = 'smem constant byte address 0x4 - core index']
  #allocation1 [shape = 'u32[72,128]{1,0:T(1,128)}', space=vmem, size = 0x9000, scoped, tag = 'internal scratch']
  %s0 = inlined_call_operand.vmem [shape: f32[16,32], index: 0, kind: input, shape index: {}]
  %s1 = inlined_call_operand.vmem [shape: f32[1,32,128], index: 1, kind: input, shape index: {}]
  %s2 = inlined_call_operand.vmem [shape: f32[1,128], index: 2, kind: input, shape index: {}]
  %s3 = inlined_call_operand.vmem [shape: f32[128,32], index: 3, kind: input, shape index: {}]
  %s4 = inlined_call_operand.vmem [shape: f32[1,32], index: 4, kind: input, shape index: {}]
  %s5 = inlined_call_operand.hbm [shape: f32[16,32], index: 5, kind: output, shape index: {}]
  %s6 = sld [smem:[#allocation0]]
  $region61: #{tpu_custom_call.1} parent=0
    _
  %s8 = ssub.s32 1, %s6
  %s9 = scalar_select 0, %s8, %s6
  $region1: #{tpu_custom_call.1} parent=0
    #allocation2 [shape = 'u8[8192]{0}', space=vmem, size = 0x2000, scoped, tag = 'output window, operand 0']
    #allocation3 [shape = 's32[2]{0}', space=sflag, size = 0x8, scoped, tag = 'scoped memory for tpu_custom_call.1']
    %10 = vsyncpa [#allocation3], 0
    %s11 = scalar_lea.sflag [#allocation3], 1
    %12 = vsyncpa %s11, 0
    loop: start=0, step=1, limit=4
    $region2: #{tpu_custom_call.1} parent=1 // loop_pre_header
      _
    $region3: #{tpu_custom_call.1} parent=1 // loop_header
      %s14 = sphi 0, %s18
      %p15 = scmp.ge.s32.totalorder %s14, 4
      %s21 = sphi 0, %s33
      %s22 = sphi 0, %s29
      %s23 = sphi 0, %s21
      %s24 = sphi 0, %s22
      %s25 = sphi 0, %s23
      %s26 = sphi 0, %s24
      %s36 = sphi 0, %s38
      %s39 = sphi 0, %s36
      %s40 = sphi 0, %s39
      %s56 = sphi 0, %s40
      %s62 = sphi 0, %s64
      %s65 = sphi 0, %s62
      %s66 = sphi 0, %s65
      %s82 = sphi 0, %s66
      %s88 = sphi 0, %s90
      %s91 = sphi 0, %s88
      %s92 = sphi 0, %s91
      %s108 = sphi 0, %s92
      %s114 = sphi 0, %s116
      %s117 = sphi 0, %s114
      %s118 = sphi 0, %s117
      %s134 = sphi 0, %s118
      %s138 = sphi 0, %s138
      %s140 = sphi 0, %s138
      %s141 = sphi 0, %s140
      %s155 = sphi 0, %s141
      %s161 = sphi 0, %s163
      %s164 = sphi 0, %s161
      %s165 = sphi 0, %s164
      %s181 = sphi 0, %s165
    $region4: #{tpu_custom_call.1} parent=1 // loop_header_branch
      %17 = sbr.rel (%p15) target = $region8
    $region5: #{tpu_custom_call.1} parent=1 // loop_body
      %s19 = ssub.s32 %s14, 1
      %s20 = ssub.s32 %s14, 2
      %s27 = sadd.s32 1, %s22
      %p28 = scmp.ge.s32.totalorder %s27, 1
      %s29 = scalar_select %p28, 0, %s27
      %s30 = sadd.s32 1, %s21
      %s31 = scalar_select %p28, %s30, %s21
      %p32 = scmp.ge.s32.totalorder %s31, 2
      %s33 = scalar_select %p32, 0, %s31
      %s34 = ssub.s32 %s21, %s33
      %p35 = scmp.eq.s32.totalorder %s34, 0
      %s37 = sadd.s32 %s36, 1
      %s38 = scalar_select %p35, %s36, %s37
      %p41 = pneg %p35
      %p42 = scmp.eq.s32.totalorder %s14, 1
      %p43 = por %p41, %p42
      %p44 = scmp.ne.s32.totalorder %s36, %s39
      %p45 = scmp.eq.s32.totalorder %s14, 0
      %p46 = por %p44, %p45
      %p47 = scmp.ne.s32.totalorder %s36, %s39
      %p48 = scmp.eq.s32.totalorder %s19, 1
      %p49 = por %p47, %p48
      %p50 = scmp.ne.s32.totalorder %s39, %s40
      %p51 = scmp.eq.s32.totalorder %s19, 0
      %p52 = por %p50, %p51
      %p53 = scmp.ne.s32.totalorder %s39, %s40
      %p54 = scmp.eq.s32.totalorder %s20, 1
      %p55 = por %p53, %p54
      %p57 = scmp.ne.s32.totalorder %s40, %s56
      %p58 = scmp.eq.s32.totalorder %s20, 0
      %p59 = por %p57, %p58
      %s60 = ssub.s32 %s22, %s29
      %p61 = scmp.eq.s32.totalorder %s60, 0
      %s63 = sadd.s32 %s62, 1
      %s64 = scalar_select %p61, %s62, %s63
      %p67 = pneg %p61
      %p68 = scmp.eq.s32.totalorder %s14, 1
      %p69 = por %p67, %p68
      %p70 = scmp.ne.s32.totalorder %s62, %s65
      %p71 = scmp.eq.s32.totalorder %s14, 0
      %p72 = por %p70, %p71
      %p73 = scmp.ne.s32.totalorder %s62, %s65
      %p74 = scmp.eq.s32.totalorder %s19, 1
      %p75 = por %p73, %p74
      %p76 = scmp.ne.s32.totalorder %s65, %s66
      %p77 = scmp.eq.s32.totalorder %s19, 0
      %p78 = por %p76, %p77
      %p79 = scmp.ne.s32.totalorder %s65, %s66
      %p80 = scmp.eq.s32.totalorder %s20, 1
      %p81 = por %p79, %p80
      %p83 = scmp.ne.s32.totalorder %s66, %s82
      %p84 = scmp.eq.s32.totalorder %s20, 0
      %p85 = por %p83, %p84
      %s86 = ssub.s32 %s22, %s29
      %p87 = scmp.eq.s32.totalorder %s86, 0
      %s89 = sadd.s32 %s88, 1
      %s90 = scalar_select %p87, %s88, %s89
      %p93 = pneg %p87
      %p94 = scmp.eq.s32.totalorder %s14, 1
      %p95 = por %p93, %p94
      %p96 = scmp.ne.s32.totalorder %s88, %s91
      %p97 = scmp.eq.s32.totalorder %s14, 0
      %p98 = por %p96, %p97
      %p99 = scmp.ne.s32.totalorder %s88, %s91
      %p100 = scmp.eq.s32.totalorder %s19, 1
      %p101 = por %p99, %p100
      %p102 = scmp.ne.s32.totalorder %s91, %s92
      %p103 = scmp.eq.s32.totalorder %s19, 0
      %p104 = por %p102, %p103
      %p105 = scmp.ne.s32.totalorder %s91, %s92
      %p106 = scmp.eq.s32.totalorder %s20, 1
      %p107 = por %p105, %p106
      %p109 = scmp.ne.s32.totalorder %s92, %s108
      %p110 = scmp.eq.s32.totalorder %s20, 0
      %p111 = por %p109, %p110
      %s112 = ssub.s32 %s22, %s29
      %p113 = scmp.eq.s32.totalorder %s112, 0
      %s115 = sadd.s32 %s114, 1
      %s116 = scalar_select %p113, %s114, %s115
      %p119 = pneg %p113
      %p120 = scmp.eq.s32.totalorder %s14, 1
      %p121 = por %p119, %p120
      %p122 = scmp.ne.s32.totalorder %s114, %s117
      %p123 = scmp.eq.s32.totalorder %s14, 0
      %p124 = por %p122, %p123
      %p125 = scmp.ne.s32.totalorder %s114, %s117
      %p126 = scmp.eq.s32.totalorder %s19, 1
      %p127 = por %p125, %p126
      %p128 = scmp.ne.s32.totalorder %s117, %s118
      %p129 = scmp.eq.s32.totalorder %s19, 0
      %p130 = por %p128, %p129
      %p131 = scmp.ne.s32.totalorder %s117, %s118
      %p132 = scmp.eq.s32.totalorder %s20, 1
      %p133 = por %p131, %p132
      %p135 = scmp.ne.s32.totalorder %s118, %s134
      %p136 = scmp.eq.s32.totalorder %s20, 0
      %p137 = por %p135, %p136
      %s139 = sadd.s32 %s138, 1
      %p142 = scmp.eq.s32.totalorder %s14, 1
      %p143 = scmp.ne.s32.totalorder %s138, %s140
      %p144 = scmp.eq.s32.totalorder %s14, 0
      %p145 = por %p143, %p144
      %p146 = scmp.ne.s32.totalorder %s138, %s140
      %p147 = scmp.eq.s32.totalorder %s19, 1
      %p148 = por %p146, %p147
      %p149 = scmp.ne.s32.totalorder %s140, %s141
      %p150 = scmp.eq.s32.totalorder %s19, 0
      %p151 = por %p149, %p150
      %p152 = scmp.ne.s32.totalorder %s140, %s141
      %p153 = scmp.eq.s32.totalorder %s20, 1
      %p154 = por %p152, %p153
      %p156 = scmp.ne.s32.totalorder %s141, %s155
      %p157 = scmp.eq.s32.totalorder %s20, 0
      %p158 = por %p156, %p157
      %s159 = ssub.s32 %s21, %s33
      %p160 = scmp.eq.s32.totalorder %s159, 0
      %s162 = sadd.s32 %s161, 1
      %s163 = scalar_select %p160, %s161, %s162
      %p166 = pneg %p160
      %p167 = scmp.eq.s32.totalorder %s14, 1
      %p168 = por %p166, %p167
      %p169 = scmp.ne.s32.totalorder %s161, %s164
      %p170 = scmp.eq.s32.totalorder %s14, 0
      %p171 = por %p169, %p170
      %p172 = scmp.ne.s32.totalorder %s161, %s164
      %p173 = scmp.eq.s32.totalorder %s19, 1
      %p174 = por %p172, %p173
      %p175 = scmp.ne.s32.totalorder %s164, %s165
      %p176 = scmp.eq.s32.totalorder %s19, 0
      %p177 = por %p175, %p176
      %p178 = scmp.ne.s32.totalorder %s164, %s165
      %p179 = scmp.eq.s32.totalorder %s20, 1
      %p180 = por %p178, %p179
      %p182 = scmp.ne.s32.totalorder %s165, %s181
      %p183 = scmp.eq.s32.totalorder %s20, 0
      %p184 = por %p182, %p183
      %p185 = scmp.le.s32.totalorder 1, %s14
      %p186 = scmp.lt.s32.totalorder %s14, 3
      %p187 = pnand %p185, %p186
      %p188 = pneg %p187
      // Predicated region
      $region9: #{tpu_custom_call.1} parent=5 // pred_check
        _
      $region10: #{tpu_custom_call.1} parent=5 // pred_check_branch
        %190 = sbr.rel (%p187) target = $region12
      $region11: #{tpu_custom_call.1} parent=5 // pred_region
        %s191 = ssub.s32 %s14, 1
        // Predicated region
        $region13: #{tpu_custom_call.1} parent=11 // pred_check
          %p192 = pneg %p78
        $region14: #{tpu_custom_call.1} parent=11 // pred_check_branch
          %194 = sbr.rel (%p192) target = $region16
        $region15: #{tpu_custom_call.1} parent=11 // pred_region
          %p195 = scmp.lt.s32.totalorder %s24, 0
          %s196 = scalar_select %p195, %s24, 0
          %s197 = smul.addr %s196, 4
          %s198 = smul.addr %s197, 8
          %s199 = scalar_lea.vmem %s1, %s198
        $region16: #{tpu_custom_call.1} parent=11 // pred_fallthru
          _
        // Predicated region
        $region17: #{tpu_custom_call.1} parent=11 // pred_check
          %p200 = pneg %p104
        $region18: #{tpu_custom_call.1} parent=11 // pred_check_branch
          %202 = sbr.rel (%p200) target = $region20
        $region19: #{tpu_custom_call.1} parent=11 // pred_region
          %p203 = scmp.lt.s32.totalorder %s24, 0
          %s204 = scalar_select %p203, %s24, 0
          %s205 = scalar_lea.vmem %s2, %s204
        $region20: #{tpu_custom_call.1} parent=11 // pred_fallthru
          _
        // Predicated region
        $region21: #{tpu_custom_call.1} parent=11 // pred_check
          %p206 = pneg %p130
        $region22: #{tpu_custom_call.1} parent=11 // pred_check_branch
          %208 = sbr.rel (%p206) target = $region24
        $region23: #{tpu_custom_call.1} parent=11 // pred_region
          %s209 = smul.u32 16, %s24
          %p210 = scmp.lt.s32.totalorder %s209, 15
          %s211 = scalar_select %p210, %s209, 15
          %s212 = smul.addr %s211, 8
          %s213 = scalar_lea.vmem %s3, %s212
          %s214 = smul.u32 16, %s24
        $region24: #{tpu_custom_call.1} parent=11 // pred_fallthru
          _
        // Predicated region
        $region25: #{tpu_custom_call.1} parent=11 // pred_check
          %p215 = pneg %p151
        $region26: #{tpu_custom_call.1} parent=11 // pred_check_branch
          %217 = sbr.rel (%p215) target = $region28
        $region27: #{tpu_custom_call.1} parent=11 // pred_region
          _
        $region28: #{tpu_custom_call.1} parent=11 // pred_fallthru
          _
      $region12: #{tpu_custom_call.1} parent=5 // pred_fallthru
        _
      %p218 = scmp.lt.s32.totalorder %s14, 2
      // Predicated region
      $region29: #{tpu_custom_call.1} parent=5 // pred_check
        %p219 = pneg %p218
      $region30: #{tpu_custom_call.1} parent=5 // pred_check_branch
        %221 = sbr.rel (%p219) target = $region32
      $region31: #{tpu_custom_call.1} parent=5 // pred_region
        // Predicated region
        $region33: #{tpu_custom_call.1} parent=31 // pred_check
          %p222 = pneg %p46
        $region34: #{tpu_custom_call.1} parent=31 // pred_check_branch
          %224 = sbr.rel (%p222) target = $region36
        $region35: #{tpu_custom_call.1} parent=31 // pred_region
          %p225 = scmp.lt.s32.totalorder %s21, 1
          %s226 = scalar_select %p225, %s21, 1
          %s227 = smul.addr %s226, 8
          %s228 = scalar_lea.vmem %s0, %s227
        $region36: #{tpu_custom_call.1} parent=31 // pred_fallthru
          _
      $region32: #{tpu_custom_call.1} parent=5 // pred_fallthru
        _
      %p229 = scmp.le.s32.totalorder 1, %s14
      %p230 = scmp.lt.s32.totalorder %s14, 3
      %p231 = pnand %p229, %p230
      %p232 = pneg %p231
      // Predicated region
      $region37: #{tpu_custom_call.1} parent=5 // pred_check
        _
      $region38: #{tpu_custom_call.1} parent=5 // pred_check_branch
        %234 = sbr.rel (%p231) target = $region40
      $region39: #{tpu_custom_call.1} parent=5 // pred_region
        %s235 = ssub.s32 %s14, 1
        %p236 = scmp.lt.s32.totalorder %s23, 1
        %s237 = scalar_select %p236, %s23, 1
        %s238 = smul.addr %s237, 8
        %s239 = scalar_lea.vmem %s0, %s238
        %p240 = pneg %p52
        %p241 = pneg %p49
        %p242 = scmp.lt.s32.totalorder %s24, 0
        %s243 = scalar_select %p242, %s24, 0
        %s244 = smul.addr %s243, 4
        %s245 = smul.addr %s244, 8
        %s246 = scalar_lea.vmem %s1, %s245
        %p247 = pneg %p78
        %p248 = pneg %p75
        %p249 = scmp.lt.s32.totalorder %s24, 0
        %s250 = scalar_select %p249, %s24, 0
        %s251 = scalar_lea.vmem %s2, %s250
        %p252 = pneg %p104
        %p253 = pneg %p101
        %s254 = smul.u32 16, %s24
        %p255 = scmp.lt.s32.totalorder %s254, 15
        %s256 = scalar_select %p255, %s254, 15
        %s257 = smul.addr %s256, 8
        %s258 = scalar_lea.vmem %s3, %s257
        %p259 = pneg %p130
        %p260 = pneg %p127
        %p261 = pneg %p151
        %p262 = pneg %p148
        %p263 = pneg %p177
        %p264 = pneg %p174
        %s265 = sand.u32 %s164, 1
        %s266 = scalar_lea.sflag [#allocation3], %s265
        %s267 = sand.u32 %s164, 1
        %s268 = smul.addr %s267, 8
        %s269 = scalar_lea.vmem [#allocation2], %s268
        %p270 = scmp.lt.s32.totalorder %s23, 1
        %s271 = scalar_select %p270, %s23, 1
        %s272 = smul.addr %s271, 8
        %s273 = scalar_lea.vmem %s0, %s272
        %p274 = scmp.lt.s32.totalorder %s24, 0
        %s275 = scalar_select %p274, %s24, 0
        %s276 = smul.addr %s275, 4
        %s277 = smul.addr %s276, 8
        %s278 = scalar_lea.vmem %s1, %s277
        %p279 = scmp.lt.s32.totalorder %s24, 0
        %s280 = scalar_select %p279, %s24, 0
        %s281 = scalar_lea.vmem %s2, %s280
        %s282 = smul.u32 16, %s24
        %p283 = scmp.lt.s32.totalorder %s282, 15
        %s284 = scalar_select %p283, %s282, 15
        %s285 = smul.addr %s284, 8
        %s286 = scalar_lea.vmem %s3, %s285
        %s287 = smul.u32 16, %s24
        %v288 = vld [vmem:[%s273] sm:$0xff]
        %v289 = vld [vmem:[%s278] sm:$0xff]
        %v290 = vld [vmem:[%s278 + $0x8] sm:$0xff]
        %v291 = vld [vmem:[%s278 + $0x10] sm:$0xff]
        %v292 = vld [vmem:[%s278 + $0x18] sm:$0xff]
        %v293 = vld [vmem:[%s281] sm:$0x1]
        %v295 = vperm.slane %v293, 0
        %vm297 = vcmask 261120
        %v299 = vsel %vm297, %v288, 0
        %301 = vmatpush.msra.mxu0 0.0
        %302 = vmatpush.msra.mxu0 0.0
        %303 = vmatpush.msra.mxu0 0.0
        %304 = vmatpush.msra.mxu0 0.0
        %305 = vmatpush.msra.mxu0 0.0
        %306 = vmatpush.msra.mxu0 0.0
        %307 = vmatpush.msra.mxu0 0.0
        %308 = vmatpush.msra.mxu0 0.0
        %309 = vmatpush.msra.mxu0 0.0
        %310 = vmatpush.msra.mxu0 0.0
        %311 = vmatpush.msra.mxu0 0.0
        %312 = vmatpush.msra.mxu0 0.0
        %313 = vmatpush.msra.mxu0 %v292
        %314 = vmatpush.msra.mxu0 %v291
        %315 = vmatpush.msra.mxu0 %v290
        %316 = vmatpush.msra.mxu0 %v289
        %317 = vmatmul.f32.gmra.mxu0 %v299
        %v318 = vpop.f32.mrf.mxu0
        %v319 = vadd.f32 %v295, %v318
        %320 = vdwg.mxu0
        %v321 = vmul.f32 %v319, 0.5
        %v322 = vmul.f32 %v319, 0.7978846
        %v323 = vmul.f32 %v319, 0.044715
        %v324 = vmul.f32 %v323, %v319
        %v325 = vadd.f32 %v324, 1.0
        %v326 = vmul.f32 %v322, %v325
        %v327 = vtanh.pop %v326
        %v328 = vadd.f32 %v327, 1.0
        %v329 = vmul.f32 %v321, %v328
        %v330 = vld [vmem:[%s286] sm:$0xff]
        %v331 = vld [vmem:[%s286 + $0x8] sm:$0xff]
        %v332 = vld [vmem:[%s286 + $0x10] sm:$0xff]
        %v333 = vld [vmem:[%s286 + $0x18] sm:$0xff]
        %v334 = vld [vmem:[%s286 + $0x20] sm:$0xff]
        %v335 = vld [vmem:[%s286 + $0x28] sm:$0xff]
        %v336 = vld [vmem:[%s286 + $0x30] sm:$0xff]
        %v337 = vld [vmem:[%s286 + $0x38] sm:$0xff]
        %v338 = vld [vmem:[%s286 + $0x40] sm:$0xff]
        %v339 = vld [vmem:[%s286 + $0x48] sm:$0xff]
        %v340 = vld [vmem:[%s286 + $0x50] sm:$0xff]
        %v341 = vld [vmem:[%s286 + $0x58] sm:$0xff]
        %v342 = vld [vmem:[%s286 + $0x60] sm:$0xff]
        %v343 = vld [vmem:[%s286 + $0x68] sm:$0xff]
        %v344 = vld [vmem:[%s286 + $0x70] sm:$0xff]
        %v345 = vld [vmem:[%s286 + $0x78] sm:$0xff]
        %346 = vmatpush.msra.mxu0 %v345
        %347 = vmatpush.msra.mxu0 %v344
        %348 = vmatpush.msra.mxu0 %v343
        %349 = vmatpush.msra.mxu0 %v342
        %350 = vmatpush.msra.mxu0 %v341
        %351 = vmatpush.msra.mxu0 %v340
        %352 = vmatpush.msra.mxu0 %v339
        %353 = vmatpush.msra.mxu0 %v338
        %354 = vmatpush.msra.mxu0 %v337
        %355 = vmatpush.msra.mxu0 %v336
        %356 = vmatpush.msra.mxu0 %v335
        %357 = vmatpush.msra.mxu0 %v334
        %358 = vmatpush.msra.mxu0 %v333
        %359 = vmatpush.msra.mxu0 %v332
        %360 = vmatpush.msra.mxu0 %v331
        %361 = vmatpush.msra.mxu0 %v330
        %362 = vmatmul.f32.gmra.mxu0 %v329
        %v363 = vpop.f32.mrf.mxu0
        %v364 = vadd.f32 0.0, %v363
        %365 = vdwg.mxu0
        %p366 = scmp.eq.s32.totalorder %s24, 0
        // Predicated region
        $region41: #{tpu_custom_call.1} parent=39 // pred_check
          %p367 = pneg %p366
        $region42: #{tpu_custom_call.1} parent=39 // pred_check_branch
          %369 = sbr.rel (%p367) target = $region44
        $region43: #{tpu_custom_call.1} parent=39 // pred_region
          %v370 = vld [vmem:[%s4] sm:$0x1]
          %v372 = vperm.slane %v370, 0
          %v374 = vadd.f32 %v364, %v372
          %375 = vst.msk [vmem:[%s269] sm:$0xff] %vm297, %v374
        $region44: #{tpu_custom_call.1} parent=39 // pred_fallthru
          _
        %p376 = scmp.ne.s32.totalorder %s24, 0
        // Predicated region
        $region45: #{tpu_custom_call.1} parent=39 // pred_check
          %p377 = pneg %p376
        $region46: #{tpu_custom_call.1} parent=39 // pred_check_branch
          %379 = sbr.rel (%p377) target = $region48
        $region47: #{tpu_custom_call.1} parent=39 // pred_region
          %v380 = vld [vmem:[%s269] sm:$0xff]
          %v381 = vadd.f32 %v380, %v364
          %382 = vst.msk [vmem:[%s269] sm:$0xff] %vm297, %v381
        $region48: #{tpu_custom_call.1} parent=39 // pred_fallthru
          _
        %s383 = sand.u32 %s164, 1
        %s384 = scalar_lea.sflag [#allocation3], %s383
        %s385 = sand.u32 %s164, 1
        %s386 = smul.addr %s385, 8
        %s387 = scalar_lea.vmem [#allocation2], %s386
        // Predicated region
        $region49: #{tpu_custom_call.1} parent=39 // pred_check
          %p388 = pneg %p174
        $region50: #{tpu_custom_call.1} parent=39 // pred_check_branch
          %390 = sbr.rel (%p388) target = $region52
        $region51: #{tpu_custom_call.1} parent=39 // pred_region
          %392 = vsyncadd %s384, 0
          %s393 = smul.addr %s23, 8
          %s394 = scalar_lea.hbm %s5, %s393
          %s396 = sshll.u32 %s387, 4
          %s397 = int_to_ptr.vmem [resolvable:$true] %s396
          %s398 = sshll.u32 %s394, 4
          %s399 = int_to_ptr.hbm [resolvable:$true] %s398
          %401 = dma.vmem_to_hbm [thread:$0]  %s397, 128, %s399, %s384
        $region52: #{tpu_custom_call.1} parent=39 // pred_fallthru
          _
      $region40: #{tpu_custom_call.1} parent=5 // pred_fallthru
        _
      %p402 = scmp.le.s32.totalorder 2, %s14
      // Predicated region
      $region53: #{tpu_custom_call.1} parent=5 // pred_check
        %p403 = pneg %p402
      $region54: #{tpu_custom_call.1} parent=5 // pred_check_branch
        %405 = sbr.rel (%p403) target = $region56
      $region55: #{tpu_custom_call.1} parent=5 // pred_region
        %s406 = ssub.s32 %s14, 2
        // Predicated region
        $region57: #{tpu_custom_call.1} parent=55 // pred_check
          %p407 = pneg %p180
        $region58: #{tpu_custom_call.1} parent=55 // pred_check_branch
          %409 = sbr.rel (%p407) target = $region60
        $region59: #{tpu_custom_call.1} parent=55 // pred_region
          %s410 = sand.u32 %s165, 1
          %s411 = scalar_lea.sflag [#allocation3], %s410
          %s412 = sand.u32 %s165, 1
          %s413 = smul.addr %s412, 8
          %s414 = scalar_lea.vmem [#allocation2], %s413
          %416 = dma.done %s411, 128
        $region60: #{tpu_custom_call.1} parent=55 // pred_fallthru
          _
      $region56: #{tpu_custom_call.1} parent=5 // pred_fallthru
        _
    $region6: #{tpu_custom_call.1} parent=1 // loop_footer
      %s18 = sadd.s32 1, %s14
    $region7: #{tpu_custom_call.1} parent=1 // loop_footer_branch
      %13 = sbr.rel target = $region3
    $region8: #{tpu_custom_call.1} parent=1 // loop_exit
      _
    %417 = vsyncpa [#allocation3], 1
    %s418 = scalar_lea.sflag [#allocation3], 1
    %419 = vsyncpa %s418, 1

</llo_original>
